<compile_context>
chip_gen: v7x
topology: tpu7x:2x2x1
jax: 0.10.0
libtpu: 0.0.40
codegen_flags: <defaults>
</compile_context>

<pallas_src>
import functools

import jax
import jax.numpy as jnp
from jax.experimental import pallas as pl
from jax.experimental.pallas import tpu as pltpu

D_IN = 784          # 28 * 28 (full last dim of x; no K padding needed)
D_H1 = 256
D_H2 = 128
D_OUT = 10
D_OUT_PAD = 128     # lane-dense output; real logits are the first 10 columns


def _round_up(n, m):
    return ((n + m - 1) // m) * m


def _cdiv(a, b):
    return (a + b - 1) // b


def _mlp_kernel(x_ref, w1_ref, b1_ref, w2_ref, b2_ref, w3_ref, b3_ref, o_ref):
    """Whole forward pass (3 matmuls + 2 ReLUs) for one batch tile, in VMEM.

    x arrives as f32 and is cast to bf16 in VMEM (saves half the x HBM bytes a
    wrapper-side bf16 copy would have cost).  Weights are bf16, all matmul
    accumulation is f32 on the MXU, biases are f32, output is stored bf16.
    """
    x = x_ref[...].astype(jnp.bfloat16)                          # [tb, 784] bf16
    h1 = jnp.dot(x, w1_ref[...], preferred_element_type=jnp.float32)
    h1 = jnp.maximum(h1 + b1_ref[...], 0.0).astype(jnp.bfloat16)  # [tb, 256]
    h2 = jnp.dot(h1, w2_ref[...], preferred_element_type=jnp.float32)
    h2 = jnp.maximum(h2 + b2_ref[...], 0.0).astype(jnp.bfloat16)  # [tb, 128]
    y = jnp.dot(h2, w3_ref[...], preferred_element_type=jnp.float32)
    o_ref[...] = (y + b3_ref[...]).astype(o_ref.dtype)            # [tb, 128] bf16


def prepare_params(params):
    """One-time conversion of nn.Linear-style params to kernel layout.

    Returns (w1_bf16[784,256], b1_f32[1,256], w2_bf16[256,128], b2_f32[1,128],
             w3_bf16[128,128] (cols zero-padded 10->128), b3_f32[1,128] padded).
    """
    w1, b1, w2, b2, w3, b3 = params
    w1b = jnp.asarray(w1, jnp.bfloat16)
    w2b = jnp.asarray(w2, jnp.bfloat16)
    w3p = jnp.pad(jnp.asarray(w3, jnp.float32),
                  ((0, 0), (0, D_OUT_PAD - D_OUT))).astype(jnp.bfloat16)
    b1f = jnp.asarray(b1, jnp.float32).reshape(1, D_H1)
    b2f = jnp.asarray(b2, jnp.float32).reshape(1, D_H2)
    b3p = jnp.pad(jnp.asarray(b3, jnp.float32).reshape(1, D_OUT),
                  ((0, 0), (0, D_OUT_PAD - D_OUT)))
    return (w1b, b1f, w2b, b2f, w3p, b3p)


@functools.partial(jax.jit, static_argnames=("tile_b",))
def image_nn_forward(x_img, prepared, tile_b=1024):
    """x_img: [B, 1, 28, 28] f32 (NCHW). prepared: output of prepare_params.

    Returns logits [B, 10] (f32), matching the PyTorch forward (bf16 matmul
    inputs, f32 accumulation).
    """
    w1b, b1f, w2b, b2f, w3p, b3p = prepared
    B = x_img.shape[0]
    x = x_img.reshape(-1, D_IN).astype(jnp.float32)   # same as torch x.view(-1, 784)

    # --- batch tiling ---------------------------------------------------
    # tile_b is always a multiple of 8 (sublane rule) and capped at 2048 so
    # the double-buffered f32 x tile stays well inside VMEM on every chip.
    tile_b = min(max(8, _round_up(int(tile_b), 8)), 2048)
    num_steps = max(_cdiv(B, tile_b), 1)
    # v7x has 2 TensorCores; keep >= 2 "parallel" grid steps when there is
    # enough work for both (harmless elsewhere).
    if B >= 512:
        num_steps = max(num_steps, 2)
    # Balance rows across the steps (avoids a nearly-all-zero trailing tile
    # when B is just over a tile boundary), then round to a sublane multiple.
    tile_b_eff = _round_up(_cdiv(B, num_steps), 8)
    num_steps = _cdiv(B, tile_b_eff)
    B_pad = num_steps * tile_b_eff

    # Only batch-pad (zero rows) -- no feature pad, no wrapper-side cast of x.
    x = jnp.pad(x, ((0, B_pad - B), (0, 0)))

    grid = (num_steps,)
    resident = lambda i: (0, 0)   # weights/biases: same whole block every step

    out = pl.pallas_call(
        _mlp_kernel,
        out_shape=jax.ShapeDtypeStruct((B_pad, D_OUT_PAD), jnp.bfloat16),
        grid_spec=pltpu.PrefetchScalarGridSpec(
            num_scalar_prefetch=0,
            grid=grid,
            in_specs=[
                # x: tiled on batch; last dim 784 == full array dim (exempt
                # from the 128-lane rule), stays f32 until the in-kernel cast.
                pl.BlockSpec((tile_b_eff, D_IN), lambda i: (i, 0)),
                pl.BlockSpec((D_IN, D_H1), resident),        # W1 (full, resident)
                pl.BlockSpec((1, D_H1), resident),           # b1
                pl.BlockSpec((D_H1, D_H2), resident),        # W2
                pl.BlockSpec((1, D_H2), resident),           # b2
                pl.BlockSpec((D_H2, D_OUT_PAD), resident),   # W3 (cols padded to 128)
                pl.BlockSpec((1, D_OUT_PAD), resident),      # b3 (cols padded to 128)
            ],
            out_specs=pl.BlockSpec((tile_b_eff, D_OUT_PAD), lambda i: (i, 0)),
        ),
        compiler_params=pltpu.CompilerParams(
            dimension_semantics=("parallel",),   # batch axis shards across v7x TCs
            vmem_limit_bytes=48 << 20,           # headroom for 2K-row f32 x tiles
        ),
    )(x, w1b, b1f, w2b, b2f, w3p, b3p)

    return out[:B, :D_OUT].astype(jnp.float32)


def init_params(key):
    """nn.Linear-style init: U(-1/sqrt(fan_in), 1/sqrt(fan_in)), stored (in, out)."""
    dims = [(784, 256), (256, 128), (128, 10)]
    params = []
    for (fan_in, fan_out) in dims:
        key, kw, kb = jax.random.split(key, 3)
        bound = 1.0 / jnp.sqrt(float(fan_in))
        w = jax.random.uniform(kw, (fan_in, fan_out), jnp.float32, -bound, bound)
        b = jax.random.uniform(kb, (1, fan_out), jnp.float32, -bound, bound)
        params += [w, b]
    return tuple(params)


def reference_forward_bf16(x_img, params):
    """Same math as the kernel (bf16 matmul inputs, f32 accumulation), plain JAX."""
    w1, b1, w2, b2, w3, b3 = params
    x = x_img.reshape(-1, D_IN).astype(jnp.bfloat16)
    h1 = jnp.dot(x, w1.astype(jnp.bfloat16), preferred_element_type=jnp.float32) + b1
    h1 = jnp.maximum(h1, 0.0).astype(jnp.bfloat16)
    h2 = jnp.dot(h1, w2.astype(jnp.bfloat16), preferred_element_type=jnp.float32) + b2
    h2 = jnp.maximum(h2, 0.0).astype(jnp.bfloat16)
    y = jnp.dot(h2, w3.astype(jnp.bfloat16), preferred_element_type=jnp.float32) + b3
    return y


if __name__ == "__main__":
    key = jax.random.PRNGKey(0)
    k_params, k_x = jax.random.split(key)
    params = init_params(k_params)
    prepared = prepare_params(params)   # one-time weight/bias layout conversion

    # Small MNIST-like batch (deliberately not a multiple of 8 to exercise the
    # batch-padding path): [B, 1, 28, 28] NCHW, flattened to 784 features.
    B = 27
    x_img = jax.random.normal(k_x, (B, 1, 28, 28), jnp.float32)

    y = image_nn_forward(x_img, prepared)        # default tile_b=1024 (auto-balanced)
    y = jax.block_until_ready(y)

    y_ref = reference_forward_bf16(x_img, params)
    assert y.shape == (B, 10), y.shape
    assert bool(jnp.all(jnp.isfinite(y))), "non-finite logits"
    # Kernel stores bf16 logits; compare against the bf16 reference loosely.
    assert bool(jnp.allclose(y, y_ref, atol=2e-2, rtol=2e-2)), "mismatch vs bf16 reference"

    print("KERNEL_OK")
</pallas_src>

<mosaic_0001>
module attributes {stable_mosaic.version = 11 : i64} {
  func.func @_mlp_kernel(%arg0: i32, %arg1: memref<32x784xf32, #tpu.memory_space<vmem>>, %arg2: memref<784x256xbf16, #tpu.memory_space<vmem>>, %arg3: memref<1x256xf32, #tpu.memory_space<vmem>>, %arg4: memref<256x128xbf16, #tpu.memory_space<vmem>>, %arg5: memref<1x128xf32, #tpu.memory_space<vmem>>, %arg6: memref<128x128xbf16, #tpu.memory_space<vmem>>, %arg7: memref<1x128xf32, #tpu.memory_space<vmem>>, %arg8: memref<32x128xbf16, #tpu.memory_space<vmem>>) attributes {dimension_semantics = [#tpu.dimension_semantics<parallel>], iteration_bounds = array<i64: 1>, scalar_prefetch = 0 : i64, scratch_operands = 0 : i64, tpu.core_type = #tpu.core_type<tc>, window_params = [{transform_indices = @transform_0, window_bounds = array<i64: 32, 784>}, {pipeline_mode = #tpu.pipeline_mode<synchronous>, transform_indices = @transform_1, window_bounds = array<i64: 784, 256>}, {pipeline_mode = #tpu.pipeline_mode<synchronous>, transform_indices = @transform_2, window_bounds = array<i64: 1, 256>}, {pipeline_mode = #tpu.pipeline_mode<synchronous>, transform_indices = @transform_3, window_bounds = array<i64: 256, 128>}, {pipeline_mode = #tpu.pipeline_mode<synchronous>, transform_indices = @transform_4, window_bounds = array<i64: 1, 128>}, {pipeline_mode = #tpu.pipeline_mode<synchronous>, transform_indices = @transform_5, window_bounds = array<i64: 128, 128>}, {pipeline_mode = #tpu.pipeline_mode<synchronous>, transform_indices = @transform_6, window_bounds = array<i64: 1, 128>}, {transform_indices = @transform_7, window_bounds = array<i64: 32, 128>}]} {
    %c0 = arith.constant 0 : index
    %c0_0 = arith.constant 0 : index
    %0 = vector.load %arg1[%c0, %c0_0] : memref<32x784xf32, #tpu.memory_space<vmem>>, vector<32x784xf32>
    %1 = arith.truncf %0 : vector<32x784xf32> to vector<32x784xbf16>
    %c0_1 = arith.constant 0 : index
    %c0_2 = arith.constant 0 : index
    %2 = vector.load %arg2[%c0_1, %c0_2] : memref<784x256xbf16, #tpu.memory_space<vmem>>, vector<784x256xbf16>
    %cst = arith.constant dense<0.000000e+00> : vector<32x256xf32>
    %3 = tpu.matmul %1, %2, %cst {dimension_numbers = #tpu.dot_dimension_numbers<[1], [0], [0], [1], [0, 0, 1, 1], [], []>} : vector<32x784xbf16>, vector<784x256xbf16>, vector<32x256xf32> -> vector<32x256xf32>
    %c0_3 = arith.constant 0 : index
    %c0_4 = arith.constant 0 : index
    %4 = vector.load %arg3[%c0_3, %c0_4] : memref<1x256xf32, #tpu.memory_space<vmem>>, vector<1x256xf32>
    %5 = vector.broadcast %4 : vector<1x256xf32> to vector<32x256xf32>
    %6 = arith.addf %3, %5 : vector<32x256xf32>
    %cst_5 = arith.constant 0.000000e+00 : f32
    %7 = vector.broadcast %cst_5 : f32 to vector<32x256xf32>
    %8 = arith.maximumf %6, %7 : vector<32x256xf32>
    %9 = arith.truncf %8 : vector<32x256xf32> to vector<32x256xbf16>
    %c0_6 = arith.constant 0 : index
    %c0_7 = arith.constant 0 : index
    %10 = vector.load %arg4[%c0_6, %c0_7] : memref<256x128xbf16, #tpu.memory_space<vmem>>, vector<256x128xbf16>
    %cst_8 = arith.constant dense<0.000000e+00> : vector<32x128xf32>
    %11 = tpu.matmul %9, %10, %cst_8 {dimension_numbers = #tpu.dot_dimension_numbers<[1], [0], [0], [1], [0, 0, 1, 1], [], []>} : vector<32x256xbf16>, vector<256x128xbf16>, vector<32x128xf32> -> vector<32x128xf32>
    %c0_9 = arith.constant 0 : index
    %c0_10 = arith.constant 0 : index
    %12 = vector.load %arg5[%c0_9, %c0_10] : memref<1x128xf32, #tpu.memory_space<vmem>>, vector<1x128xf32>
    %13 = vector.broadcast %12 : vector<1x128xf32> to vector<32x128xf32>
    %14 = arith.addf %11, %13 : vector<32x128xf32>
    %cst_11 = arith.constant 0.000000e+00 : f32
    %15 = vector.broadcast %cst_11 : f32 to vector<32x128xf32>
    %16 = arith.maximumf %14, %15 : vector<32x128xf32>
    %17 = arith.truncf %16 : vector<32x128xf32> to vector<32x128xbf16>
    %c0_12 = arith.constant 0 : index
    %c0_13 = arith.constant 0 : index
    %18 = vector.load %arg6[%c0_12, %c0_13] : memref<128x128xbf16, #tpu.memory_space<vmem>>, vector<128x128xbf16>
    %cst_14 = arith.constant dense<0.000000e+00> : vector<32x128xf32>
    %19 = tpu.matmul %17, %18, %cst_14 {dimension_numbers = #tpu.dot_dimension_numbers<[1], [0], [0], [1], [0, 0, 1, 1], [], []>} : vector<32x128xbf16>, vector<128x128xbf16>, vector<32x128xf32> -> vector<32x128xf32>
    %c0_15 = arith.constant 0 : index
    %c0_16 = arith.constant 0 : index
    %20 = vector.load %arg7[%c0_15, %c0_16] : memref<1x128xf32, #tpu.memory_space<vmem>>, vector<1x128xf32>
    %21 = vector.broadcast %20 : vector<1x128xf32> to vector<32x128xf32>
    %22 = arith.addf %19, %21 : vector<32x128xf32>
    %23 = arith.truncf %22 : vector<32x128xf32> to vector<32x128xbf16>
    %c0_17 = arith.constant 0 : index
    %c0_18 = arith.constant 0 : index
    %24 = vector.load %arg8[%c0_17, %c0_18] : memref<32x128xbf16, #tpu.memory_space<vmem>>, vector<32x128xbf16>
    tpu.vector_store %arg8[%c0_17, %c0_18], %23 {strides = array<i32>} : memref<32x128xbf16, #tpu.memory_space<vmem>>, vector<32x128xbf16>,
    return
  }
  func.func @transform_0(%arg0: i32) -> (i32, i32) {
    %c0_i32 = arith.constant 0 : i32
    %c0_i32_0 = arith.constant 0 : i32
    return %arg0, %c0_i32 : i32, i32
  }
  func.func @transform_1(%arg0: i32) -> (i32, i32) {
    %c0_i32 = arith.constant 0 : i32
    %c0_i32_0 = arith.constant 0 : i32
    %c0_i32_1 = arith.constant 0 : i32
    return %c0_i32, %c0_i32_0 : i32, i32
  }
  func.func @transform_2(%arg0: i32) -> (i32, i32) {
    %c0_i32 = arith.constant 0 : i32
    %c0_i32_0 = arith.constant 0 : i32
    %c0_i32_1 = arith.constant 0 : i32
    return %c0_i32, %c0_i32_0 : i32, i32
  }
  func.func @transform_3(%arg0: i32) -> (i32, i32) {
    %c0_i32 = arith.constant 0 : i32
    %c0_i32_0 = arith.constant 0 : i32
    %c0_i32_1 = arith.constant 0 : i32
    return %c0_i32, %c0_i32_0 : i32, i32
  }
  func.func @transform_4(%arg0: i32) -> (i32, i32) {
    %c0_i32 = arith.constant 0 : i32
    %c0_i32_0 = arith.constant 0 : i32
    %c0_i32_1 = arith.constant 0 : i32
    return %c0_i32, %c0_i32_0 : i32, i32
  }
  func.func @transform_5(%arg0: i32) -> (i32, i32) {
    %c0_i32 = arith.constant 0 : i32
    %c0_i32_0 = arith.constant 0 : i32
    %c0_i32_1 = arith.constant 0 : i32
    return %c0_i32, %c0_i32_0 : i32, i32
  }
  func.func @transform_6(%arg0: i32) -> (i32, i32) {
    %c0_i32 = arith.constant 0 : i32
    %c0_i32_0 = arith.constant 0 : i32
    %c0_i32_1 = arith.constant 0 : i32
    return %c0_i32, %c0_i32_0 : i32, i32
  }
  func.func @transform_7(%arg0: i32) -> (i32, i32) {
    %c0_i32 = arith.constant 0 : i32
    %c0_i32_0 = arith.constant 0 : i32
    return %arg0, %c0_i32 : i32, i32
  }
}

</mosaic_0001>

<llo_original>
// kernel: image_nn_forward.1
$region0: #{image_nn_forward.1}
  #allocation0 [shape = 'u32[]', space=smem, size = 0x4, offset = 0x4, fixed_abs, tag = 'smem constant byte address 0x4 - core index']
  #allocation1 [shape = 'u32[144,128]{1,0:T(1,128)}', space=vmem, size = 0x12000, scoped, tag = 'internal scratch']
  %s0 = inlined_call_operand.vmem [shape: f32[32,784], index: 0, kind: input, shape index: {}]
  %s1 = inlined_call_operand.vmem [shape: bf16[784,256], index: 1, kind: input, shape index: {}]
  %s2 = inlined_call_operand.vmem [shape: f32[1,256], index: 2, kind: input, shape index: {}]
  %s3 = inlined_call_operand.vmem [shape: bf16[256,128], index: 3, kind: input, shape index: {}]
  %s4 = inlined_call_operand.vmem [shape: f32[1,128], index: 4, kind: input, shape index: {}]
  %s5 = inlined_call_operand.vmem [shape: bf16[128,128], index: 5, kind: input, shape index: {}]
  %s6 = inlined_call_operand.vmem [shape: f32[1,128], index: 6, kind: input, shape index: {}]
  %s7 = inlined_call_operand.vmem [shape: bf16[32,128], index: 7, kind: output, shape index: {}]
  %s8 = sld [smem:[#allocation0]]
  $region38: #{image_nn_forward.1} parent=0
    _
  %s10 = ssub.s32 1, %s8
  %s11 = scalar_select 0, %s10, %s8
  // Predicated region
  $region2: #{image_nn_forward.1} parent=0 // pred_check
    _
  $region3: #{image_nn_forward.1} parent=0 // pred_check_branch
    %13 = sbr.rel (0) target = $region5
  $region4: #{image_nn_forward.1} parent=0 // pred_region
    _
  $region5: #{image_nn_forward.1} parent=0 // pred_fallthru
    _
  // Predicated region
  $region6: #{image_nn_forward.1} parent=0 // pred_check
    _
  $region7: #{image_nn_forward.1} parent=0 // pred_check_branch
    %15 = sbr.rel (0) target = $region9
  $region8: #{image_nn_forward.1} parent=0 // pred_region
    _
  $region9: #{image_nn_forward.1} parent=0 // pred_fallthru
    _
  // Predicated region
  $region10: #{image_nn_forward.1} parent=0 // pred_check
    _
  $region11: #{image_nn_forward.1} parent=0 // pred_check_branch
    %17 = sbr.rel (0) target = $region13
  $region12: #{image_nn_forward.1} parent=0 // pred_region
    _
  $region13: #{image_nn_forward.1} parent=0 // pred_fallthru
    _
  // Predicated region
  $region14: #{image_nn_forward.1} parent=0 // pred_check
    _
  $region15: #{image_nn_forward.1} parent=0 // pred_check_branch
    %19 = sbr.rel (0) target = $region17
  $region16: #{image_nn_forward.1} parent=0 // pred_region
    _
  $region17: #{image_nn_forward.1} parent=0 // pred_fallthru
    _
  // Predicated region
  $region18: #{image_nn_forward.1} parent=0 // pred_check
    _
  $region19: #{image_nn_forward.1} parent=0 // pred_check_branch
    %21 = sbr.rel (0) target = $region21
  $region20: #{image_nn_forward.1} parent=0 // pred_region
    _
  $region21: #{image_nn_forward.1} parent=0 // pred_fallthru
    _
  // Predicated region
  $region22: #{image_nn_forward.1} parent=0 // pred_check
    _
  $region23: #{image_nn_forward.1} parent=0 // pred_check_branch
    %23 = sbr.rel (0) target = $region25
  $region24: #{image_nn_forward.1} parent=0 // pred_region
    _
  $region25: #{image_nn_forward.1} parent=0 // pred_fallthru
    _
  // Predicated region
  $region26: #{image_nn_forward.1} parent=0 // pred_check
    _
  $region27: #{image_nn_forward.1} parent=0 // pred_check_branch
    %25 = sbr.rel (0) target = $region29
  $region28: #{image_nn_forward.1} parent=0 // pred_region
    _
  $region29: #{image_nn_forward.1} parent=0 // pred_fallthru
    _
  %v27 = vld [vmem:[%s0] sm:$0xff]
  %v28 = vld [vmem:[%s0 + $0x8] sm:$0xff]
  %v29 = vld [vmem:[%s0 + $0x10] sm:$0xff]
  %v30 = vld [vmem:[%s0 + $0x18] sm:$0xff]
  %v31 = vld [vmem:[%s0 + $0x20] sm:$0xff]
  %v32 = vld [vmem:[%s0 + $0x28] sm:$0xff]
  %v33 = vld [vmem:[%s0 + $0x30] sm:$0xff]
  %v34 = vld [vmem:[%s0 + $0x38] sm:$0xff]
  %v35 = vld [vmem:[%s0 + $0x40] sm:$0xff]
  %v36 = vld [vmem:[%s0 + $0x48] sm:$0xff]
  %v37 = vld [vmem:[%s0 + $0x50] sm:$0xff]
  %v38 = vld [vmem:[%s0 + $0x58] sm:$0xff]
  %v39 = vld [vmem:[%s0 + $0x60] sm:$0xff]
  %v40 = vld [vmem:[%s0 + $0x68] sm:$0xff]
  %v41 = vld [vmem:[%s0 + $0x70] sm:$0xff]
  %v42 = vld [vmem:[%s0 + $0x78] sm:$0xff]
  %v43 = vld [vmem:[%s0 + $0x80] sm:$0xff]
  %v44 = vld [vmem:[%s0 + $0x88] sm:$0xff]
  %v45 = vld [vmem:[%s0 + $0x90] sm:$0xff]
  %v46 = vld [vmem:[%s0 + $0x98] sm:$0xff]
  %v47 = vld [vmem:[%s0 + $0xa0] sm:$0xff]
  %v48 = vld [vmem:[%s0 + $0xa8] sm:$0xff]
  %v49 = vld [vmem:[%s0 + $0xb0] sm:$0xff]
  %v50 = vld [vmem:[%s0 + $0xb8] sm:$0xff]
  %v51 = vld [vmem:[%s0 + $0xc0] sm:$0xff]
  %v52 = vld [vmem:[%s0 + $0xc8] sm:$0xff]
  %v53 = vld [vmem:[%s0 + $0xd0] sm:$0xff]
  %v54 = vld [vmem:[%s0 + $0xd8] sm:$0xff]
  %v55 = vpack.c.bf16 %v34, %v27
  %v56 = vpack.c.bf16 %v35, %v28
  %v57 = vpack.c.bf16 %v36, %v29
  %v58 = vpack.c.bf16 %v37, %v30
  %v59 = vpack.c.bf16 %v38, %v31
  %v60 = vpack.c.bf16 %v39, %v32
  %v61 = vpack.c.bf16 %v40, %v33
  %v62 = vpack.c.bf16 %v48, %v41
  %v63 = vpack.c.bf16 %v49, %v42
  %v64 = vpack.c.bf16 %v50, %v43
  %v65 = vpack.c.bf16 %v51, %v44
  %v66 = vpack.c.bf16 %v52, %v45
  %v67 = vpack.c.bf16 %v53, %v46
  %v68 = vpack.c.bf16 %v54, %v47
  %v69 = vld [vmem:[%s1] sm:$0xff]
  %v70 = vld [vmem:[%s1 + $0x8] sm:$0xff]
  %v71 = vld [vmem:[%s1 + $0x10] sm:$0xff]
  %v72 = vld [vmem:[%s1 + $0x18] sm:$0xff]
  %v73 = vld [vmem:[%s1 + $0x20] sm:$0xff]
  %v74 = vld [vmem:[%s1 + $0x28] sm:$0xff]
  %v75 = vld [vmem:[%s1 + $0x30] sm:$0xff]
  %v76 = vld [vmem:[%s1 + $0x38] sm:$0xff]
  %v77 = vld [vmem:[%s1 + $0x40] sm:$0xff]
  %v78 = vld [vmem:[%s1 + $0x48] sm:$0xff]
  %v79 = vld [vmem:[%s1 + $0x50] sm:$0xff]
  %v80 = vld [vmem:[%s1 + $0x58] sm:$0xff]
  %v81 = vld [vmem:[%s1 + $0x60] sm:$0xff]
  %v82 = vld [vmem:[%s1 + $0x68] sm:$0xff]
  %v83 = vld [vmem:[%s1 + $0x70] sm:$0xff]
  %v84 = vld [vmem:[%s1 + $0x78] sm:$0xff]
  %v85 = vld [vmem:[%s1 + $0x80] sm:$0xff]
  %v86 = vld [vmem:[%s1 + $0x88] sm:$0xff]
  %v87 = vld [vmem:[%s1 + $0x90] sm:$0xff]
  %v88 = vld [vmem:[%s1 + $0x98] sm:$0xff]
  %v89 = vld [vmem:[%s1 + $0xa0] sm:$0xff]
  %v90 = vld [vmem:[%s1 + $0xa8] sm:$0xff]
  %v91 = vld [vmem:[%s1 + $0xb0] sm:$0xff]
  %v92 = vld [vmem:[%s1 + $0xb8] sm:$0xff]
  %v93 = vld [vmem:[%s1 + $0xc0] sm:$0xff]
  %v94 = vld [vmem:[%s1 + $0xc8] sm:$0xff]
  %v95 = vld [vmem:[%s1 + $0xd0] sm:$0xff]
  %v96 = vld [vmem:[%s1 + $0xd8] sm:$0xff]
  %v97 = vld [vmem:[%s1 + $0xe0] sm:$0xff]
  %v98 = vld [vmem:[%s1 + $0xe8] sm:$0xff]
  %v99 = vld [vmem:[%s1 + $0xf0] sm:$0xff]
  %v100 = vld [vmem:[%s1 + $0xf8] sm:$0xff]
  %v101 = vld [vmem:[%s1 + $0x100] sm:$0xff]
  %v102 = vld [vmem:[%s1 + $0x108] sm:$0xff]
  %v103 = vld [vmem:[%s1 + $0x110] sm:$0xff]
  %v104 = vld [vmem:[%s1 + $0x118] sm:$0xff]
  %v105 = vld [vmem:[%s1 + $0x120] sm:$0xff]
  %v106 = vld [vmem:[%s1 + $0x128] sm:$0xff]
  %v107 = vld [vmem:[%s1 + $0x130] sm:$0xff]
  %v108 = vld [vmem:[%s1 + $0x138] sm:$0xff]
  %v109 = vld [vmem:[%s1 + $0x140] sm:$0xff]
  %v110 = vld [vmem:[%s1 + $0x148] sm:$0xff]
  %v111 = vld [vmem:[%s1 + $0x150] sm:$0xff]
  %v112 = vld [vmem:[%s1 + $0x158] sm:$0xff]
  %v113 = vld [vmem:[%s1 + $0x160] sm:$0xff]
  %v114 = vld [vmem:[%s1 + $0x168] sm:$0xff]
  %v115 = vld [vmem:[%s1 + $0x170] sm:$0xff]
  %v116 = vld [vmem:[%s1 + $0x178] sm:$0xff]
  %v117 = vld [vmem:[%s1 + $0x180] sm:$0xff]
  %v118 = vld [vmem:[%s1 + $0x188] sm:$0xff]
  %v119 = vld [vmem:[%s1 + $0x190] sm:$0xff]
  %v120 = vld [vmem:[%s1 + $0x198] sm:$0xff]
  %v121 = vld [vmem:[%s1 + $0x1a0] sm:$0xff]
  %v122 = vld [vmem:[%s1 + $0x1a8] sm:$0xff]
  %v123 = vld [vmem:[%s1 + $0x1b0] sm:$0xff]
  %v124 = vld [vmem:[%s1 + $0x1b8] sm:$0xff]
  %v125 = vld [vmem:[%s1 + $0x1c0] sm:$0xff]
  %v126 = vld [vmem:[%s1 + $0x1c8] sm:$0xff]
  %v127 = vld [vmem:[%s1 + $0x1d0] sm:$0xff]
  %v128 = vld [vmem:[%s1 + $0x1d8] sm:$0xff]
  %v129 = vld [vmem:[%s1 + $0x1e0] sm:$0xff]
  %v130 = vld [vmem:[%s1 + $0x1e8] sm:$0xff]
  %v131 = vld [vmem:[%s1 + $0x1f0] sm:$0xff]
  %v132 = vld [vmem:[%s1 + $0x1f8] sm:$0xff]
  %v133 = vld [vmem:[%s1 + $0x200] sm:$0xff]
  %v134 = vld [vmem:[%s1 + $0x208] sm:$0xff]
  %v135 = vld [vmem:[%s1 + $0x210] sm:$0xff]
  %v136 = vld [vmem:[%s1 + $0x218] sm:$0xff]
  %v137 = vld [vmem:[%s1 + $0x220] sm:$0xff]
  %v138 = vld [vmem:[%s1 + $0x228] sm:$0xff]
  %v139 = vld [vmem:[%s1 + $0x230] sm:$0xff]
  %v140 = vld [vmem:[%s1 + $0x238] sm:$0xff]
  %v141 = vld [vmem:[%s1 + $0x240] sm:$0xff]
  %v142 = vld [vmem:[%s1 + $0x248] sm:$0xff]
  %v143 = vld [vmem:[%s1 + $0x250] sm:$0xff]
  %v144 = vld [vmem:[%s1 + $0x258] sm:$0xff]
  %v145 = vld [vmem:[%s1 + $0x260] sm:$0xff]
  %v146 = vld [vmem:[%s1 + $0x268] sm:$0xff]
  %v147 = vld [vmem:[%s1 + $0x270] sm:$0xff]
  %v148 = vld [vmem:[%s1 + $0x278] sm:$0xff]
  %v149 = vld [vmem:[%s1 + $0x280] sm:$0xff]
  %v150 = vld [vmem:[%s1 + $0x288] sm:$0xff]
  %v151 = vld [vmem:[%s1 + $0x290] sm:$0xff]
  %v152 = vld [vmem:[%s1 + $0x298] sm:$0xff]
  %v153 = vld [vmem:[%s1 + $0x2a0] sm:$0xff]
  %v154 = vld [vmem:[%s1 + $0x2a8] sm:$0xff]
  %v155 = vld [vmem:[%s1 + $0x2b0] sm:$0xff]
  %v156 = vld [vmem:[%s1 + $0x2b8] sm:$0xff]
  %v157 = vld [vmem:[%s1 + $0x2c0] sm:$0xff]
  %v158 = vld [vmem:[%s1 + $0x2c8] sm:$0xff]
  %v159 = vld [vmem:[%s1 + $0x2d0] sm:$0xff]
  %v160 = vld [vmem:[%s1 + $0x2d8] sm:$0xff]
  %v161 = vld [vmem:[%s1 + $0x2e0] sm:$0xff]
  %v162 = vld [vmem:[%s1 + $0x2e8] sm:$0xff]
  %v163 = vld [vmem:[%s1 + $0x2f0] sm:$0xff]
  %v164 = vld [vmem:[%s1 + $0x2f8] sm:$0xff]
  %v165 = vld [vmem:[%s1 + $0x300] sm:$0xff]
  %v166 = vld [vmem:[%s1 + $0x308] sm:$0xff]
  %v167 = vld [vmem:[%s2] sm:$0x3]
  %v169 = vlaneseq
  %v170 = vshrl.u32 %v169, 7
  %v171 = vsub.s32 0, %v170
  %v172 = vrot.slane %v167, %v171
  %v173 = vlaneseq
  %v174 = vshrl.u32 %v173, 7
  %v175 = vsub.s32 1, %v174
  %v176 = vrot.slane %v167, %v175
  %v277 = vunpack.c.l.b16 %v69
  %v278 = vunpack.c.h.b16 %v69
  %v279 = vunpack.c.l.b16 %v70
  %v280 = vunpack.c.h.b16 %v70
  %v281 = vunpack.c.l.b16 %v71
  %v282 = vunpack.c.h.b16 %v71
  %v283 = vunpack.c.l.b16 %v72
  %v284 = vunpack.c.h.b16 %v72
  %v285 = vunpack.c.l.b16 %v73
  %v286 = vunpack.c.h.b16 %v73
  %v287 = vunpack.c.l.b16 %v74
  %v288 = vunpack.c.h.b16 %v74
  %v289 = vunpack.c.l.b16 %v75
  %v290 = vunpack.c.h.b16 %v75
  %v291 = vunpack.c.l.b16 %v76
  %v292 = vunpack.c.h.b16 %v76
  %v293 = vunpack.c.l.b16 %v77
  %v294 = vunpack.c.h.b16 %v77
  %v295 = vunpack.c.l.b16 %v78
  %v296 = vunpack.c.h.b16 %v78
  %v297 = vunpack.c.l.b16 %v79
  %v298 = vunpack.c.h.b16 %v79
  %v299 = vunpack.c.l.b16 %v80
  %v300 = vunpack.c.h.b16 %v80
  %v301 = vunpack.c.l.b16 %v81
  %v302 = vunpack.c.h.b16 %v81
  %v303 = vunpack.c.l.b16 %v82
  %v304 = vunpack.c.h.b16 %v82
  %v305 = vunpack.c.l.b16 %v83
  %v306 = vunpack.c.h.b16 %v83
  %v307 = vunpack.c.l.b16 %v84
  %v308 = vunpack.c.h.b16 %v84
  %v309 = vunpack.c.l.b16 %v85
  %v310 = vunpack.c.h.b16 %v85
  %v311 = vunpack.c.l.b16 %v86
  %v312 = vunpack.c.h.b16 %v86
  %v313 = vunpack.c.l.b16 %v87
  %v314 = vunpack.c.h.b16 %v87
  %v315 = vunpack.c.l.b16 %v88
  %v316 = vunpack.c.h.b16 %v88
  %v317 = vunpack.c.l.b16 %v89
  %v318 = vunpack.c.h.b16 %v89
  %v319 = vunpack.c.l.b16 %v90
  %v320 = vunpack.c.h.b16 %v90
  %v321 = vunpack.c.l.b16 %v91
  %v322 = vunpack.c.h.b16 %v91
  %v323 = vunpack.c.l.b16 %v92
  %v324 = vunpack.c.h.b16 %v92
  %v325 = vunpack.c.l.b16 %v93
  %v326 = vunpack.c.h.b16 %v93
  %v327 = vunpack.c.l.b16 %v94
  %v328 = vunpack.c.h.b16 %v94
  %v329 = vunpack.c.l.b16 %v95
  %v330 = vunpack.c.h.b16 %v95
  %v331 = vunpack.c.l.b16 %v96
  %v332 = vunpack.c.h.b16 %v96
  %v333 = vunpack.c.l.b16 %v97
  %v334 = vunpack.c.h.b16 %v97
  %v335 = vunpack.c.l.b16 %v98
  %v336 = vunpack.c.h.b16 %v98
  %v337 = vunpack.c.l.b16 %v99
  %v338 = vunpack.c.h.b16 %v99
  %v339 = vunpack.c.l.b16 %v100
  %v340 = vunpack.c.h.b16 %v100
  %v341 = vunpack.c.l.b16 %v101
  %v342 = vunpack.c.h.b16 %v101
  %v343 = vunpack.c.l.b16 %v102
  %v344 = vunpack.c.h.b16 %v102
  %v345 = vunpack.c.l.b16 %v103
  %v346 = vunpack.c.h.b16 %v103
  %v347 = vunpack.c.l.b16 %v104
  %v348 = vunpack.c.h.b16 %v104
  %v349 = vunpack.c.l.b16 %v105
  %v350 = vunpack.c.h.b16 %v105
  %v351 = vunpack.c.l.b16 %v106
  %v352 = vunpack.c.h.b16 %v106
  %v353 = vunpack.c.l.b16 %v107
  %v354 = vunpack.c.h.b16 %v107
  %v355 = vunpack.c.l.b16 %v108
  %v356 = vunpack.c.h.b16 %v108
  %v357 = vunpack.c.l.b16 %v109
  %v358 = vunpack.c.h.b16 %v109
  %v359 = vunpack.c.l.b16 %v110
  %v360 = vunpack.c.h.b16 %v110
  %v361 = vunpack.c.l.b16 %v111
  %v362 = vunpack.c.h.b16 %v111
  %v363 = vunpack.c.l.b16 %v112
  %v364 = vunpack.c.h.b16 %v112
  %v365 = vunpack.c.l.b16 %v113
  %v366 = vunpack.c.h.b16 %v113
  %v367 = vunpack.c.l.b16 %v114
  %v368 = vunpack.c.h.b16 %v114
  %v369 = vunpack.c.l.b16 %v115
  %v370 = vunpack.c.h.b16 %v115
  %v371 = vunpack.c.l.b16 %v116
  %v372 = vunpack.c.h.b16 %v116
  %v373 = vunpack.c.l.b16 %v117
  %v374 = vunpack.c.h.b16 %v117
  %v375 = vunpack.c.l.b16 %v118
  %v376 = vunpack.c.h.b16 %v118
  %v377 = vunpack.c.l.b16 %v119
  %v378 = vunpack.c.h.b16 %v119
  %v379 = vunpack.c.l.b16 %v120
  %v380 = vunpack.c.h.b16 %v120
  %v381 = vunpack.c.l.b16 %v121
  %v382 = vunpack.c.h.b16 %v121
  %v383 = vunpack.c.l.b16 %v122
  %v384 = vunpack.c.h.b16 %v122
  %v385 = vunpack.c.l.b16 %v123
  %v386 = vunpack.c.h.b16 %v123
  %v387 = vunpack.c.l.b16 %v124
  %v388 = vunpack.c.h.b16 %v124
  %v389 = vunpack.c.l.b16 %v125
  %v390 = vunpack.c.h.b16 %v125
  %v391 = vunpack.c.l.b16 %v126
  %v392 = vunpack.c.h.b16 %v126
  %v393 = vunpack.c.l.b16 %v127
  %v394 = vunpack.c.h.b16 %v127
  %v395 = vunpack.c.l.b16 %v128
  %v396 = vunpack.c.h.b16 %v128
  %v397 = vunpack.c.l.b16 %v129
  %v398 = vunpack.c.h.b16 %v129
  %v399 = vunpack.c.l.b16 %v130
  %v400 = vunpack.c.h.b16 %v130
  %v401 = vunpack.c.l.b16 %v131
  %v402 = vunpack.c.h.b16 %v131
  %v403 = vunpack.c.l.b16 %v132
  %v404 = vunpack.c.h.b16 %v132
  %v405 = vunpack.c.l.b16 %v133
  %v406 = vunpack.c.h.b16 %v133
  %v407 = vunpack.c.l.b16 %v134
  %v408 = vunpack.c.h.b16 %v134
  %v409 = vunpack.c.l.b16 %v135
  %v410 = vunpack.c.h.b16 %v135
  %v411 = vunpack.c.l.b16 %v136
  %v412 = vunpack.c.h.b16 %v136
  %v413 = vunpack.c.l.b16 %v137
  %v414 = vunpack.c.h.b16 %v137
  %v415 = vunpack.c.l.b16 %v138
  %v416 = vunpack.c.h.b16 %v138
  %v417 = vunpack.c.l.b16 %v139
  %v418 = vunpack.c.h.b16 %v139
  %v419 = vunpack.c.l.b16 %v140
  %v420 = vunpack.c.h.b16 %v140
  %v421 = vunpack.c.l.b16 %v141
  %v422 = vunpack.c.h.b16 %v141
  %v423 = vunpack.c.l.b16 %v142
  %v424 = vunpack.c.h.b16 %v142
  %v425 = vunpack.c.l.b16 %v143
  %v426 = vunpack.c.h.b16 %v143
  %v427 = vunpack.c.l.b16 %v144
  %v428 = vunpack.c.h.b16 %v144
  %v429 = vunpack.c.l.b16 %v145
  %v430 = vunpack.c.h.b16 %v145
  %v431 = vunpack.c.l.b16 %v146
  %v432 = vunpack.c.h.b16 %v146
  %v433 = vunpack.c.l.b16 %v147
  %v434 = vunpack.c.h.b16 %v147
  %v435 = vunpack.c.l.b16 %v148
  %v436 = vunpack.c.h.b16 %v148
  %v437 = vunpack.c.l.b16 %v149
  %v438 = vunpack.c.h.b16 %v149
  %v439 = vunpack.c.l.b16 %v150
  %v440 = vunpack.c.h.b16 %v150
  %v441 = vunpack.c.l.b16 %v151
  %v442 = vunpack.c.h.b16 %v151
  %v443 = vunpack.c.l.b16 %v152
  %v444 = vunpack.c.h.b16 %v152
  %v445 = vunpack.c.l.b16 %v153
  %v446 = vunpack.c.h.b16 %v153
  %v447 = vunpack.c.l.b16 %v154
  %v448 = vunpack.c.h.b16 %v154
  %v449 = vunpack.c.l.b16 %v155
  %v450 = vunpack.c.h.b16 %v155
  %v451 = vunpack.c.l.b16 %v156
  %v452 = vunpack.c.h.b16 %v156
  %v453 = vunpack.c.l.b16 %v157
  %v454 = vunpack.c.h.b16 %v157
  %v455 = vunpack.c.l.b16 %v158
  %v456 = vunpack.c.h.b16 %v158
  %v457 = vunpack.c.l.b16 %v159
  %v458 = vunpack.c.h.b16 %v159
  %v459 = vunpack.c.l.b16 %v160
  %v460 = vunpack.c.h.b16 %v160
  %v461 = vunpack.c.l.b16 %v161
  %v462 = vunpack.c.h.b16 %v161
  %v463 = vunpack.c.l.b16 %v162
  %v464 = vunpack.c.h.b16 %v162
  %v465 = vunpack.c.l.b16 %v163
  %v466 = vunpack.c.h.b16 %v163
  %v467 = vunpack.c.l.b16 %v164
  %v468 = vunpack.c.h.b16 %v164
  %v469 = vunpack.c.l.b16 %v165
  %v470 = vunpack.c.h.b16 %v165
  %v471 = vunpack.c.l.b16 %v166
  %v472 = vunpack.c.h.b16 %v166
  %v473 = vpack.c.b16 %v279, %v277
  %v474 = vpack.c.b16 %v280, %v278
  %v475 = vpack.c.b16 %v283, %v281
  %v476 = vpack.c.b16 %v284, %v282
  %v477 = vpack.c.b16 %v287, %v285
  %v478 = vpack.c.b16 %v288, %v286
  %v479 = vpack.c.b16 %v291, %v289
  %v480 = vpack.c.b16 %v292, %v290
  %v481 = vpack.c.b16 %v295, %v293
  %v482 = vpack.c.b16 %v296, %v294
  %v483 = vpack.c.b16 %v299, %v297
  %v484 = vpack.c.b16 %v300, %v298
  %v485 = vpack.c.b16 %v303, %v301
  %v486 = vpack.c.b16 %v304, %v302
  %v487 = vpack.c.b16 %v307, %v305
  %v488 = vpack.c.b16 %v308, %v306
  %v489 = vpack.c.b16 %v311, %v309
  %v490 = vpack.c.b16 %v312, %v310
  %v491 = vpack.c.b16 %v315, %v313
  %v492 = vpack.c.b16 %v316, %v314
  %v493 = vpack.c.b16 %v319, %v317
  %v494 = vpack.c.b16 %v320, %v318
  %v495 = vpack.c.b16 %v323, %v321
  %v496 = vpack.c.b16 %v324, %v322
  %v497 = vpack.c.b16 %v327, %v325
  %v498 = vpack.c.b16 %v328, %v326
  %v499 = vpack.c.b16 %v331, %v329
  %v500 = vpack.c.b16 %v332, %v330
  %v501 = vpack.c.b16 %v335, %v333
  %v502 = vpack.c.b16 %v336, %v334
  %v503 = vpack.c.b16 %v339, %v337
  %v504 = vpack.c.b16 %v340, %v338
  %v505 = vpack.c.b16 %v343, %v341
  %v506 = vpack.c.b16 %v344, %v342
  %v507 = vpack.c.b16 %v347, %v345
  %v508 = vpack.c.b16 %v348, %v346
  %v509 = vpack.c.b16 %v351, %v349
  %v510 = vpack.c.b16 %v352, %v350
  %v511 = vpack.c.b16 %v355, %v353
  %v512 = vpack.c.b16 %v356, %v354
  %v513 = vpack.c.b16 %v359, %v357
  %v514 = vpack.c.b16 %v360, %v358
  %v515 = vpack.c.b16 %v363, %v361
  %v516 = vpack.c.b16 %v364, %v362
  %v517 = vpack.c.b16 %v367, %v365
  %v518 = vpack.c.b16 %v368, %v366
  %v519 = vpack.c.b16 %v371, %v369
  %v520 = vpack.c.b16 %v372, %v370
  %v521 = vpack.c.b16 %v375, %v373
  %v522 = vpack.c.b16 %v376, %v374
  %v523 = vpack.c.b16 %v379, %v377
  %v524 = vpack.c.b16 %v380, %v378
  %v525 = vpack.c.b16 %v383, %v381
  %v526 = vpack.c.b16 %v384, %v382
  %v527 = vpack.c.b16 %v387, %v385
  %v528 = vpack.c.b16 %v388, %v386
  %v529 = vpack.c.b16 %v391, %v389
  %v530 = vpack.c.b16 %v392, %v390
  %v531 = vpack.c.b16 %v395, %v393
  %v532 = vpack.c.b16 %v396, %v394
  %v533 = vpack.c.b16 %v399, %v397
  %v534 = vpack.c.b16 %v400, %v398
  %v535 = vpack.c.b16 %v403, %v401
  %v536 = vpack.c.b16 %v404, %v402
  %v537 = vpack.c.b16 %v407, %v405
  %v538 = vpack.c.b16 %v408, %v406
  %v539 = vpack.c.b16 %v411, %v409
  %v540 = vpack.c.b16 %v412, %v410
  %v541 = vpack.c.b16 %v415, %v413
  %v542 = vpack.c.b16 %v416, %v414
  %v543 = vpack.c.b16 %v419, %v417
  %v544 = vpack.c.b16 %v420, %v418
  %v545 = vpack.c.b16 %v423, %v421
  %v546 = vpack.c.b16 %v424, %v422
  %v547 = vpack.c.b16 %v427, %v425
  %v548 = vpack.c.b16 %v428, %v426
  %v549 = vpack.c.b16 %v431, %v429
  %v550 = vpack.c.b16 %v432, %v430
  %v551 = vpack.c.b16 %v435, %v433
  %v552 = vpack.c.b16 %v436, %v434
  %v553 = vpack.c.b16 %v439, %v437
  %v554 = vpack.c.b16 %v440, %v438
  %v555 = vpack.c.b16 %v443, %v441
  %v556 = vpack.c.b16 %v444, %v442
  %v557 = vpack.c.b16 %v447, %v445
  %v558 = vpack.c.b16 %v448, %v446
  %v559 = vpack.c.b16 %v451, %v449
  %v560 = vpack.c.b16 %v452, %v450
  %v561 = vpack.c.b16 %v455, %v453
  %v562 = vpack.c.b16 %v456, %v454
  %v563 = vpack.c.b16 %v459, %v457
  %v564 = vpack.c.b16 %v460, %v458
  %v565 = vpack.c.b16 %v463, %v461
  %v566 = vpack.c.b16 %v464, %v462
  %v567 = vpack.c.b16 %v467, %v465
  %v568 = vpack.c.b16 %v468, %v466
  %v569 = vpack.c.b16 %v471, %v469
  %v570 = vpack.c.b16 %v472, %v470
  %vm669 = vcmask 130048
  %v671 = vsel %vm669, %v61, 0
  %v674 = vsel %vm669, %v68, 0
  %676 = vmatprep.subr.bf16.mxu0 %v474
  %677 = vmatpush1.bf16.msra.mxu0 %v473
  %678 = vmatprep.subr.bf16.mxu0 %v476
  %679 = vmatpush1.bf16.msra.mxu0 %v475
  %680 = vmatprep.subr.bf16.mxu0 %v478
  %681 = vmatpush1.bf16.msra.mxu0 %v477
  %682 = vmatprep.subr.bf16.mxu0 %v480
  %683 = vmatpush1.bf16.msra.mxu0 %v479
  %684 = vmatprep.subr.bf16.mxu0 %v482
  %685 = vmatpush1.bf16.msra.mxu0 %v481
  %686 = vmatprep.subr.bf16.mxu0 %v484
  %687 = vmatpush1.bf16.msra.mxu0 %v483
  %688 = vmatprep.subr.bf16.mxu0 %v486
  %689 = vmatpush1.bf16.msra.mxu0 %v485
  %690 = vmatprep.subr.bf16.mxu0 %v488
  %691 = vmatpush1.bf16.msra.mxu0 %v487
  %692 = vmatprep.subr.bf16.mxu0 %v490
  %693 = vmatpush1.bf16.msra.mxu0 %v489
  %694 = vmatprep.subr.bf16.mxu0 %v492
  %695 = vmatpush1.bf16.msra.mxu0 %v491
  %696 = vmatprep.subr.bf16.mxu0 %v494
  %697 = vmatpush1.bf16.msra.mxu0 %v493
  %698 = vmatprep.subr.bf16.mxu0 %v496
  %699 = vmatpush1.bf16.msra.mxu0 %v495
  %700 = vmatprep.subr.bf16.mxu0 %v498
  %701 = vmatpush1.bf16.msra.mxu0 %v497
  %702 = vmatprep.subr.bf16.mxu0 %v500
  %703 = vmatpush1.bf16.msra.mxu0 %v499
  %704 = vmatprep.subr.bf16.mxu0 %v502
  %705 = vmatpush1.bf16.msra.mxu0 %v501
  %706 = vmatprep.subr.bf16.mxu0 %v504
  %707 = vmatpush1.bf16.msra.mxu0 %v503
  %708 = vmatprep.mubr.bf16.mxu0 %v56
  %709 = vmatmul.mubr.bf16.gmra.mrb[0].mxu0 %v55
  %v710 = vpop.f32.mrb[0].mxu0
  %v711 = vadd.f32 %v172, %v710
  %v712 = vpop.f32.mrb[0].mxu0
  %v713 = vadd.f32 %v176, %v712
  %v714 = vpop.f32.mrb[0].mxu0
  %v715 = vadd.f32 %v172, %v714
  %v716 = vpop.f32.mrb[0].mxu0
  %v717 = vadd.f32 %v176, %v716
  %718 = vmatprep.mubr.bf16.mxu0 %v63
  %719 = vmatmul.mubr.bf16.gmra.mrb[0].mxu0 %v62
  %v720 = vpop.f32.mrb[0].mxu0
  %v721 = vadd.f32 %v172, %v720
  %v722 = vpop.f32.mrb[0].mxu0
  %v723 = vadd.f32 %v176, %v722
  %v724 = vpop.f32.mrb[0].mxu0
  %v725 = vadd.f32 %v172, %v724
  %v726 = vpop.f32.mrb[0].mxu0
  %v727 = vadd.f32 %v176, %v726
  %728 = vdwg.mxu0
  %729 = vmatprep.subr.bf16.mxu0 %v506
  %730 = vmatpush1.bf16.msra.mxu0 %v505
  %731 = vmatprep.subr.bf16.mxu0 %v508
  %732 = vmatpush1.bf16.msra.mxu0 %v507
  %733 = vmatprep.subr.bf16.mxu0 %v510
  %734 = vmatpush1.bf16.msra.mxu0 %v509
  %735 = vmatprep.subr.bf16.mxu0 %v512
  %736 = vmatpush1.bf16.msra.mxu0 %v511
  %737 = vmatprep.subr.bf16.mxu0 %v514
  %738 = vmatpush1.bf16.msra.mxu0 %v513
  %739 = vmatprep.subr.bf16.mxu0 %v516
  %740 = vmatpush1.bf16.msra.mxu0 %v515
  %741 = vmatprep.subr.bf16.mxu0 %v518
  %742 = vmatpush1.bf16.msra.mxu0 %v517
  %743 = vmatprep.subr.bf16.mxu0 %v520
  %744 = vmatpush1.bf16.msra.mxu0 %v519
  %745 = vmatprep.subr.bf16.mxu0 %v522
  %746 = vmatpush1.bf16.msra.mxu0 %v521
  %747 = vmatprep.subr.bf16.mxu0 %v524
  %748 = vmatpush1.bf16.msra.mxu0 %v523
  %749 = vmatprep.subr.bf16.mxu0 %v526
  %750 = vmatpush1.bf16.msra.mxu0 %v525
  %751 = vmatprep.subr.bf16.mxu0 %v528
  %752 = vmatpush1.bf16.msra.mxu0 %v527
  %753 = vmatprep.subr.bf16.mxu0 %v530
  %754 = vmatpush1.bf16.msra.mxu0 %v529
  %755 = vmatprep.subr.bf16.mxu0 %v532
  %756 = vmatpush1.bf16.msra.mxu0 %v531
  %757 = vmatprep.subr.bf16.mxu0 %v534
  %758 = vmatpush1.bf16.msra.mxu0 %v533
  %759 = vmatprep.subr.bf16.mxu0 %v536
  %760 = vmatpush1.bf16.msra.mxu0 %v535
  %761 = vmatprep.mubr.bf16.mxu0 %v58
  %762 = vmatmul.mubr.bf16.gmra.mrb[0].mxu0 %v57
  %v763 = vpop.f32.mrb[0].mxu0
  %v764 = vadd.f32 %v711, %v763
  %v765 = vpop.f32.mrb[0].mxu0
  %v766 = vadd.f32 %v713, %v765
  %v767 = vpop.f32.mrb[0].mxu0
  %v768 = vadd.f32 %v715, %v767
  %v769 = vpop.f32.mrb[0].mxu0
  %v770 = vadd.f32 %v717, %v769
  %771 = vmatprep.mubr.bf16.mxu0 %v65
  %772 = vmatmul.mubr.bf16.gmra.mrb[0].mxu0 %v64
  %v773 = vpop.f32.mrb[0].mxu0
  %v774 = vadd.f32 %v721, %v773
  %v775 = vpop.f32.mrb[0].mxu0
  %v776 = vadd.f32 %v723, %v775
  %v777 = vpop.f32.mrb[0].mxu0
  %v778 = vadd.f32 %v725, %v777
  %v779 = vpop.f32.mrb[0].mxu0
  %v780 = vadd.f32 %v727, %v779
  %781 = vdwg.mxu0
  %782 = vmatprep.subr.bf16.mxu0 %v538
  %783 = vmatpush1.bf16.msra.mxu0 %v537
  %784 = vmatprep.subr.bf16.mxu0 %v540
  %785 = vmatpush1.bf16.msra.mxu0 %v539
  %786 = vmatprep.subr.bf16.mxu0 %v542
  %787 = vmatpush1.bf16.msra.mxu0 %v541
  %788 = vmatprep.subr.bf16.mxu0 %v544
  %789 = vmatpush1.bf16.msra.mxu0 %v543
  %790 = vmatprep.subr.bf16.mxu0 %v546
  %791 = vmatpush1.bf16.msra.mxu0 %v545
  %792 = vmatprep.subr.bf16.mxu0 %v548
  %793 = vmatpush1.bf16.msra.mxu0 %v547
  %794 = vmatprep.subr.bf16.mxu0 %v550
  %795 = vmatpush1.bf16.msra.mxu0 %v549
  %796 = vmatprep.subr.bf16.mxu0 %v552
  %797 = vmatpush1.bf16.msra.mxu0 %v551
  %798 = vmatprep.subr.bf16.mxu0 %v554
  %799 = vmatpush1.bf16.msra.mxu0 %v553
  %800 = vmatprep.subr.bf16.mxu0 %v556
  %801 = vmatpush1.bf16.msra.mxu0 %v555
  %802 = vmatprep.subr.bf16.mxu0 %v558
  %803 = vmatpush1.bf16.msra.mxu0 %v557
  %804 = vmatprep.subr.bf16.mxu0 %v560
  %805 = vmatpush1.bf16.msra.mxu0 %v559
  %806 = vmatprep.subr.bf16.mxu0 %v562
  %807 = vmatpush1.bf16.msra.mxu0 %v561
  %808 = vmatprep.subr.bf16.mxu0 %v564
  %809 = vmatpush1.bf16.msra.mxu0 %v563
  %810 = vmatprep.subr.bf16.mxu0 %v566
  %811 = vmatpush1.bf16.msra.mxu0 %v565
  %812 = vmatprep.subr.bf16.mxu0 %v568
  %813 = vmatpush1.bf16.msra.mxu0 %v567
  %814 = vmatprep.mubr.bf16.mxu0 %v60
  %815 = vmatmul.mubr.bf16.gmra.mrb[0].mxu0 %v59
  %v816 = vpop.f32.mrb[0].mxu0
  %v817 = vadd.f32 %v764, %v816
  %v818 = vpop.f32.mrb[0].mxu0
  %v819 = vadd.f32 %v766, %v818
  %v820 = vpop.f32.mrb[0].mxu0
  %v821 = vadd.f32 %v768, %v820
  %v822 = vpop.f32.mrb[0].mxu0
  %v823 = vadd.f32 %v770, %v822
  %824 = vmatprep.mubr.bf16.mxu0 %v67
  %825 = vmatmul.mubr.bf16.gmra.mrb[0].mxu0 %v66
  %v826 = vpop.f32.mrb[0].mxu0
  %v827 = vadd.f32 %v774, %v826
  %v828 = vpop.f32.mrb[0].mxu0
  %v829 = vadd.f32 %v776, %v828
  %v830 = vpop.f32.mrb[0].mxu0
  %v831 = vadd.f32 %v778, %v830
  %v832 = vpop.f32.mrb[0].mxu0
  %v833 = vadd.f32 %v780, %v832
  %834 = vdwg.mxu0
  %835 = vmatprep.subr.bf16.mxu0 %v570
  %836 = vmatpush1.bf16.msra.mxu0 %v569
  %837 = vmatprep.subr.bf16.mxu0 0
  %838 = vmatpush1.bf16.msra.mxu0 0
  %839 = vmatprep.subr.bf16.mxu0 0
  %840 = vmatpush1.bf16.msra.mxu0 0
  %841 = vmatprep.subr.bf16.mxu0 0
  %842 = vmatpush1.bf16.msra.mxu0 0
  %843 = vmatprep.subr.bf16.mxu0 0
  %844 = vmatpush1.bf16.msra.mxu0 0
  %845 = vmatprep.subr.bf16.mxu0 0
  %846 = vmatpush1.bf16.msra.mxu0 0
  %847 = vmatprep.subr.bf16.mxu0 0
  %848 = vmatpush1.bf16.msra.mxu0 0
  %849 = vmatprep.subr.bf16.mxu0 0
  %850 = vmatpush1.bf16.msra.mxu0 0
  %851 = vmatprep.subr.bf16.mxu0 0
  %852 = vmatpush1.bf16.msra.mxu0 0
  %853 = vmatprep.subr.bf16.mxu0 0
  %854 = vmatpush1.bf16.msra.mxu0 0
  %855 = vmatprep.subr.bf16.mxu0 0
  %856 = vmatpush1.bf16.msra.mxu0 0
  %857 = vmatprep.subr.bf16.mxu0 0
  %858 = vmatpush1.bf16.msra.mxu0 0
  %859 = vmatprep.subr.bf16.mxu0 0
  %860 = vmatpush1.bf16.msra.mxu0 0
  %861 = vmatprep.subr.bf16.mxu0 0
  %862 = vmatpush1.bf16.msra.mxu0 0
  %863 = vmatprep.subr.bf16.mxu0 0
  %864 = vmatpush1.bf16.msra.mxu0 0
  %865 = vmatprep.subr.bf16.mxu0 0
  %866 = vmatpush1.bf16.msra.mxu0 0
  %867 = vmatprep.mubr.bf16.mxu0 0
  %868 = vmatmul.mubr.bf16.gmra.mrb[0].mxu0 %v671
  %v869 = vpop.f32.mrb[0].mxu0
  %v870 = vadd.f32 %v817, %v869
  %v871 = vpop.f32.mrb[0].mxu0
  %v872 = vadd.f32 %v819, %v871
  %v873 = vpop.f32.mrb[0].mxu0
  %v874 = vadd.f32 %v821, %v873
  %v875 = vpop.f32.mrb[0].mxu0
  %v876 = vadd.f32 %v823, %v875
  %877 = vmatprep.mubr.bf16.mxu0 0
  %878 = vmatmul.mubr.bf16.gmra.mrb[0].mxu0 %v674
  %v879 = vpop.f32.mrb[0].mxu0
  %v880 = vadd.f32 %v827, %v879
  %v881 = vpop.f32.mrb[0].mxu0
  %v882 = vadd.f32 %v829, %v881
  %v883 = vpop.f32.mrb[0].mxu0
  %v884 = vadd.f32 %v831, %v883
  %v885 = vpop.f32.mrb[0].mxu0
  %v886 = vadd.f32 %v833, %v885
  %887 = vdwg.mxu0
  %v888 = vmax.f32 %v870, 0.0
  %v889 = vmax.f32 %v872, 0.0
  %v890 = vmax.f32 %v874, 0.0
  %v891 = vmax.f32 %v876, 0.0
  %v892 = vmax.f32 %v880, 0.0
  %v893 = vmax.f32 %v882, 0.0
  %v894 = vmax.f32 %v884, 0.0
  %v895 = vmax.f32 %v886, 0.0
  %v896 = vpack.c.bf16 %v890, %v888
  %v897 = vpack.c.bf16 %v891, %v889
  %v898 = vpack.c.bf16 %v894, %v892
  %v899 = vpack.c.bf16 %v895, %v893
  %v900 = vld [vmem:[%s3] sm:$0xf]
  %v901 = vld [vmem:[%s3 + $0x4] sm:$0xf]
  %v902 = vld [vmem:[%s3 + $0x8] sm:$0xf]
  %v903 = vld [vmem:[%s3 + $0xc] sm:$0xf]
  %v904 = vld [vmem:[%s3 + $0x10] sm:$0xf]
  %v905 = vld [vmem:[%s3 + $0x14] sm:$0xf]
  %v906 = vld [vmem:[%s3 + $0x18] sm:$0xf]
  %v907 = vld [vmem:[%s3 + $0x1c] sm:$0xf]
  %v908 = vld [vmem:[%s3 + $0x20] sm:$0xf]
  %v909 = vld [vmem:[%s3 + $0x24] sm:$0xf]
  %v910 = vld [vmem:[%s3 + $0x28] sm:$0xf]
  %v911 = vld [vmem:[%s3 + $0x2c] sm:$0xf]
  %v912 = vld [vmem:[%s3 + $0x30] sm:$0xf]
  %v913 = vld [vmem:[%s3 + $0x34] sm:$0xf]
  %v914 = vld [vmem:[%s3 + $0x38] sm:$0xf]
  %v915 = vld [vmem:[%s3 + $0x3c] sm:$0xf]
  %v916 = vld [vmem:[%s3 + $0x40] sm:$0xf]
  %v917 = vld [vmem:[%s3 + $0x44] sm:$0xf]
  %v918 = vld [vmem:[%s3 + $0x48] sm:$0xf]
  %v919 = vld [vmem:[%s3 + $0x4c] sm:$0xf]
  %v920 = vld [vmem:[%s3 + $0x50] sm:$0xf]
  %v921 = vld [vmem:[%s3 + $0x54] sm:$0xf]
  %v922 = vld [vmem:[%s3 + $0x58] sm:$0xf]
  %v923 = vld [vmem:[%s3 + $0x5c] sm:$0xf]
  %v924 = vld [vmem:[%s3 + $0x60] sm:$0xf]
  %v925 = vld [vmem:[%s3 + $0x64] sm:$0xf]
  %v926 = vld [vmem:[%s3 + $0x68] sm:$0xf]
  %v927 = vld [vmem:[%s3 + $0x6c] sm:$0xf]
  %v928 = vld [vmem:[%s3 + $0x70] sm:$0xf]
  %v929 = vld [vmem:[%s3 + $0x74] sm:$0xf]
  %v930 = vld [vmem:[%s3 + $0x78] sm:$0xf]
  %v931 = vld [vmem:[%s3 + $0x7c] sm:$0xf]
  %v932 = vld [vmem:[%s4] sm:$0x1]
  %v934 = vlaneseq
  %v935 = vshrl.u32 %v934, 7
  %v936 = vsub.s32 0, %v935
  %v937 = vrot.slane %v932, %v936
  %v971 = vunpack.c.l.b16 %v900
  %v972 = vunpack.c.l.b16 %v901
  %v973 = vunpack.c.l.b16 %v902
  %v974 = vunpack.c.l.b16 %v903
  %v975 = vunpack.c.l.b16 %v904
  %v976 = vunpack.c.l.b16 %v905
  %v977 = vunpack.c.l.b16 %v906
  %v978 = vunpack.c.l.b16 %v907
  %v979 = vunpack.c.l.b16 %v908
  %v980 = vunpack.c.l.b16 %v909
  %v981 = vunpack.c.l.b16 %v910
  %v982 = vunpack.c.l.b16 %v911
  %v983 = vunpack.c.l.b16 %v912
  %v984 = vunpack.c.l.b16 %v913
  %v985 = vunpack.c.l.b16 %v914
  %v986 = vunpack.c.l.b16 %v915
  %v987 = vunpack.c.l.b16 %v916
  %v988 = vunpack.c.l.b16 %v917
  %v989 = vunpack.c.l.b16 %v918
  %v990 = vunpack.c.l.b16 %v919
  %v991 = vunpack.c.l.b16 %v920
  %v992 = vunpack.c.l.b16 %v921
  %v993 = vunpack.c.l.b16 %v922
  %v994 = vunpack.c.l.b16 %v923
  %v995 = vunpack.c.l.b16 %v924
  %v996 = vunpack.c.l.b16 %v925
  %v997 = vunpack.c.l.b16 %v926
  %v998 = vunpack.c.l.b16 %v927
  %v999 = vunpack.c.l.b16 %v928
  %v1000 = vunpack.c.l.b16 %v929
  %v1001 = vunpack.c.l.b16 %v930
  %v1002 = vunpack.c.l.b16 %v931
  %v1003 = vpack.c.b16 %v972, %v971
  %v1004 = vpack.c.b16 %v974, %v973
  %v1005 = vpack.c.b16 %v976, %v975
  %v1006 = vpack.c.b16 %v978, %v977
  %v1007 = vpack.c.b16 %v980, %v979
  %v1008 = vpack.c.b16 %v982, %v981
  %v1009 = vpack.c.b16 %v984, %v983
  %v1010 = vpack.c.b16 %v986, %v985
  %v1011 = vpack.c.b16 %v988, %v987
  %v1012 = vpack.c.b16 %v990, %v989
  %v1013 = vpack.c.b16 %v992, %v991
  %v1014 = vpack.c.b16 %v994, %v993
  %v1015 = vpack.c.b16 %v996, %v995
  %v1016 = vpack.c.b16 %v998, %v997
  %v1017 = vpack.c.b16 %v1000, %v999
  %v1018 = vpack.c.b16 %v1002, %v1001
  %1035 = vmatprep.subr.bf16.mxu0 0
  %1036 = vmatpush1.bf16.msra.mxu0 %v1003
  %1037 = vmatprep.subr.bf16.mxu0 0
  %1038 = vmatpush1.bf16.msra.mxu0 %v1004
  %1039 = vmatprep.subr.bf16.mxu0 0
  %1040 = vmatpush1.bf16.msra.mxu0 %v1005
  %1041 = vmatprep.subr.bf16.mxu0 0
  %1042 = vmatpush1.bf16.msra.mxu0 %v1006
  %1043 = vmatprep.subr.bf16.mxu0 0
  %1044 = vmatpush1.bf16.msra.mxu0 %v1007
  %1045 = vmatprep.subr.bf16.mxu0 0
  %1046 = vmatpush1.bf16.msra.mxu0 %v1008
  %1047 = vmatprep.subr.bf16.mxu0 0
  %1048 = vmatpush1.bf16.msra.mxu0 %v1009
  %1049 = vmatprep.subr.bf16.mxu0 0
  %1050 = vmatpush1.bf16.msra.mxu0 %v1010
  %1051 = vmatprep.subr.bf16.mxu0 0
  %1052 = vmatpush1.bf16.msra.mxu0 %v1011
  %1053 = vmatprep.subr.bf16.mxu0 0
  %1054 = vmatpush1.bf16.msra.mxu0 %v1012
  %1055 = vmatprep.subr.bf16.mxu0 0
  %1056 = vmatpush1.bf16.msra.mxu0 %v1013
  %1057 = vmatprep.subr.bf16.mxu0 0
  %1058 = vmatpush1.bf16.msra.mxu0 %v1014
  %1059 = vmatprep.subr.bf16.mxu0 0
  %1060 = vmatpush1.bf16.msra.mxu0 %v1015
  %1061 = vmatprep.subr.bf16.mxu0 0
  %1062 = vmatpush1.bf16.msra.mxu0 %v1016
  %1063 = vmatprep.subr.bf16.mxu0 0
  %1064 = vmatpush1.bf16.msra.mxu0 %v1017
  %1065 = vmatprep.subr.bf16.mxu0 0
  %1066 = vmatpush1.bf16.msra.mxu0 %v1018
  %1067 = vmatprep.mubr.bf16.mxu0 %v897
  %1068 = vmatmul.mubr.bf16.gmra.mrb[0].mxu0 %v896
  %v1069 = vpop.f32.mrb[0].mxu0
  %v1070 = vadd.f32 %v937, %v1069
  %v1071 = vpop.f32.mrb[0].mxu0
  %v1072 = vpop.f32.mrb[0].mxu0
  %v1073 = vadd.f32 %v937, %v1072
  %v1074 = vpop.f32.mrb[0].mxu0
  %1075 = vmatprep.mubr.bf16.mxu0 %v899
  %1076 = vmatmul.mubr.bf16.gmra.mrb[0].mxu0 %v898
  %v1077 = vpop.f32.mrb[0].mxu0
  %v1078 = vadd.f32 %v937, %v1077
  %v1079 = vpop.f32.mrb[0].mxu0
  %v1080 = vpop.f32.mrb[0].mxu0
  %v1081 = vadd.f32 %v937, %v1080
  %v1082 = vpop.f32.mrb[0].mxu0
  %1083 = vdwg.mxu0
  %v1084 = vmax.f32 %v1070, 0.0
  %v1085 = vmax.f32 %v1073, 0.0
  %v1086 = vmax.f32 %v1078, 0.0
  %v1087 = vmax.f32 %v1081, 0.0
  %v1088 = vpack.c.bf16 %v1085, %v1084
  %v1089 = vpack.c.bf16 %v1087, %v1086
  %v1090 = vld [vmem:[%s5] sm:$0xf]
  %v1091 = vld [vmem:[%s5 + $0x4] sm:$0xf]
  %v1092 = vld [vmem:[%s5 + $0x8] sm:$0xf]
  %v1093 = vld [vmem:[%s5 + $0xc] sm:$0xf]
  %v1094 = vld [vmem:[%s5 + $0x10] sm:$0xf]
  %v1095 = vld [vmem:[%s5 + $0x14] sm:$0xf]
  %v1096 = vld [vmem:[%s5 + $0x18] sm:$0xf]
  %v1097 = vld [vmem:[%s5 + $0x1c] sm:$0xf]
  %v1098 = vld [vmem:[%s5 + $0x20] sm:$0xf]
  %v1099 = vld [vmem:[%s5 + $0x24] sm:$0xf]
  %v1100 = vld [vmem:[%s5 + $0x28] sm:$0xf]
  %v1101 = vld [vmem:[%s5 + $0x2c] sm:$0xf]
  %v1102 = vld [vmem:[%s5 + $0x30] sm:$0xf]
  %v1103 = vld [vmem:[%s5 + $0x34] sm:$0xf]
  %v1104 = vld [vmem:[%s5 + $0x38] sm:$0xf]
  %v1105 = vld [vmem:[%s5 + $0x3c] sm:$0xf]
  %v1106 = vld [vmem:[%s6] sm:$0x1]
  %v1108 = vlaneseq
  %v1109 = vshrl.u32 %v1108, 7
  %v1110 = vsub.s32 0, %v1109
  %v1111 = vrot.slane %v1106, %v1110
  %v1129 = vunpack.c.l.b16 %v1090
  %v1130 = vunpack.c.l.b16 %v1091
  %v1131 = vunpack.c.l.b16 %v1092
  %v1132 = vunpack.c.l.b16 %v1093
  %v1133 = vunpack.c.l.b16 %v1094
  %v1134 = vunpack.c.l.b16 %v1095
  %v1135 = vunpack.c.l.b16 %v1096
  %v1136 = vunpack.c.l.b16 %v1097
  %v1137 = vunpack.c.l.b16 %v1098
  %v1138 = vunpack.c.l.b16 %v1099
  %v1139 = vunpack.c.l.b16 %v1100
  %v1140 = vunpack.c.l.b16 %v1101
  %v1141 = vunpack.c.l.b16 %v1102
  %v1142 = vunpack.c.l.b16 %v1103
  %v1143 = vunpack.c.l.b16 %v1104
  %v1144 = vunpack.c.l.b16 %v1105
  %v1145 = vpack.c.b16 %v1130, %v1129
  %v1146 = vpack.c.b16 %v1132, %v1131
  %v1147 = vpack.c.b16 %v1134, %v1133
  %v1148 = vpack.c.b16 %v1136, %v1135
  %v1149 = vpack.c.b16 %v1138, %v1137
  %v1150 = vpack.c.b16 %v1140, %v1139
  %v1151 = vpack.c.b16 %v1142, %v1141
  %v1152 = vpack.c.b16 %v1144, %v1143
  %1161 = vmatprep.subr.bf16.mxu0 0
  %1162 = vmatpush1.bf16.msra.mxu0 %v1145
  %1163 = vmatprep.subr.bf16.mxu0 0
  %1164 = vmatpush1.bf16.msra.mxu0 %v1146
  %1165 = vmatprep.subr.bf16.mxu0 0
  %1166 = vmatpush1.bf16.msra.mxu0 %v1147
  %1167 = vmatprep.subr.bf16.mxu0 0
  %1168 = vmatpush1.bf16.msra.mxu0 %v1148
  %1169 = vmatprep.subr.bf16.mxu0 0
  %1170 = vmatpush1.bf16.msra.mxu0 %v1149
  %1171 = vmatprep.subr.bf16.mxu0 0
  %1172 = vmatpush1.bf16.msra.mxu0 %v1150
  %1173 = vmatprep.subr.bf16.mxu0 0
  %1174 = vmatpush1.bf16.msra.mxu0 %v1151
  %1175 = vmatprep.subr.bf16.mxu0 0
  %1176 = vmatpush1.bf16.msra.mxu0 %v1152
  %1177 = vmatprep.subr.bf16.mxu0 0
  %1178 = vmatpush1.bf16.msra.mxu0 0
  %1179 = vmatprep.subr.bf16.mxu0 0
  %1180 = vmatpush1.bf16.msra.mxu0 0
  %1181 = vmatprep.subr.bf16.mxu0 0
  %1182 = vmatpush1.bf16.msra.mxu0 0
  %1183 = vmatprep.subr.bf16.mxu0 0
  %1184 = vmatpush1.bf16.msra.mxu0 0
  %1185 = vmatprep.subr.bf16.mxu0 0
  %1186 = vmatpush1.bf16.msra.mxu0 0
  %1187 = vmatprep.subr.bf16.mxu0 0
  %1188 = vmatpush1.bf16.msra.mxu0 0
  %1189 = vmatprep.subr.bf16.mxu0 0
  %1190 = vmatpush1.bf16.msra.mxu0 0
  %1191 = vmatprep.subr.bf16.mxu0 0
  %1192 = vmatpush1.bf16.msra.mxu0 0
  %1193 = vmatprep.mubr.bf16.mxu0 0
  %1194 = vmatmul.mubr.bf16.gmra.mrb[0].mxu0 %v1088
  %v1195 = vpop.f32.mrb[0].mxu0
  %v1196 = vadd.f32 %v1111, %v1195
  %v1197 = vpop.f32.mrb[0].mxu0
  %v1198 = vpop.f32.mrb[0].mxu0
  %v1199 = vadd.f32 %v1111, %v1198
  %v1200 = vpop.f32.mrb[0].mxu0
  %1201 = vmatprep.mubr.bf16.mxu0 0
  %1202 = vmatmul.mubr.bf16.gmra.mrb[0].mxu0 %v1089
  %v1203 = vpop.f32.mrb[0].mxu0
  %v1204 = vadd.f32 %v1111, %v1203
  %v1205 = vpop.f32.mrb[0].mxu0
  %v1206 = vpop.f32.mrb[0].mxu0
  %v1207 = vadd.f32 %v1111, %v1206
  %v1208 = vpop.f32.mrb[0].mxu0
  %1209 = vdwg.mxu0
  %v1210 = vpack.c.bf16 %v1199, %v1196
  %v1211 = vpack.c.bf16 %v1207, %v1204
  %v1214 = vunpack.c.l.b16 %v1210
  %v1215 = vunpack.c.h.b16 %v1210
  %v1216 = vunpack.c.l.b16 %v1211
  %v1217 = vunpack.c.h.b16 %v1211
  %v1218 = vpack.c.b16 %v1214, %v1214
  %v1219 = vpack.c.b16 %v1215, %v1215
  %v1220 = vpack.c.b16 %v1216, %v1216
  %v1221 = vpack.c.b16 %v1217, %v1217
  %1226 = vst [vmem:[%s7] sm:$0xf] %v1218
  %1227 = vst [vmem:[%s7 + $0x4] sm:$0xf] %v1219
  %1228 = vst [vmem:[%s7 + $0x8] sm:$0xf] %v1220
  %1229 = vst [vmem:[%s7 + $0xc] sm:$0xf] %v1221
  // Predicated region
  $region30: #{image_nn_forward.1} parent=0 // pred_check
    _
  $region31: #{image_nn_forward.1} parent=0 // pred_check_branch
    %1231 = sbr.rel (0) target = $region33
  $region32: #{image_nn_forward.1} parent=0 // pred_region
    _
  $region33: #{image_nn_forward.1} parent=0 // pred_fallthru
    _
  // Predicated region
  $region34: #{image_nn_forward.1} parent=0 // pred_check
    _
  $region35: #{image_nn_forward.1} parent=0 // pred_check_branch
    %1233 = sbr.rel (0) target = $region37
  $region36: #{image_nn_forward.1} parent=0 // pred_region
    _
  $region37: #{image_nn_forward.1} parent=0 // pred_fallthru
    _

</llo_original>
